<compile_context>
chip_gen: v5e
topology: v5e:2x2
jax: 0.10.0
libtpu: 0.0.40
codegen_flags: <defaults>
</compile_context>

<pallas_src>
import functools

import numpy as np
import jax
import jax.numpy as jnp
from jax.experimental import pallas as pl
from jax.experimental.pallas import tpu as pltpu


def _round_up(x, m):
    return (x + m - 1) // m * m


def _augru_kernel(x_ref, att_ref, wi_hbm, wh_hbm, b_hbm, hx_hbm,
                  out_ref,
                  h_ref, gi_ref, wi_ref, wh_ref, b_ref,
                  *, chunk, maxb_pad, hidden_dim, unroll):
    """One grid step processes `chunk` packed time-steps.

    x_ref   : [chunk*maxb_pad, D]   streamed inputs for this chunk (matmul dtype)
    att_ref : [chunk*maxb_pad, H]   attention weights pre-broadcast to H lanes (f32)
    wi_hbm  : [D, 3H]  (ANY)        input-projection weights, columns [r | z | n]
    wh_hbm  : [H, 3H]  (ANY)        recurrent weights, columns [r | z | n]
    b_hbm   : [2, 3H]  (ANY)        row 0 = b_ih, row 1 = b_hh
    hx_hbm  : [maxb_pad, H] (ANY)   initial hidden state (zero-padded)
    out_ref : [chunk*maxb_pad, H]   per-step hidden outputs (f32)
    h_ref   : VMEM [maxb_pad, H]    hidden state carried across chunks (f32)
    gi_ref  : VMEM [chunk*maxb_pad, 3H]  chunk-level input projection (f32)
    wi_ref/wh_ref/b_ref : VMEM      single-buffered resident parameters
    """
    H = hidden_dim

    @pl.when(pl.program_id(0) == 0)
    def _():
        # Load the grid-invariant parameters once into single-buffered VMEM
        # scratch (avoids the 2x pipeline buffers a constant-index BlockSpec
        # would allocate) and initialise the carried hidden state.
        pltpu.sync_copy(wi_hbm, wi_ref)
        pltpu.sync_copy(wh_hbm, wh_ref)
        pltpu.sync_copy(b_hbm, b_ref)
        pltpu.sync_copy(hx_hbm, h_ref)

    # ---- chunk-level work (off the serial critical path) -------------------
    # Input projection for every step of this chunk in one large-M MXU matmul,
    # with the input bias folded in.  Gate column layout: [r | z | n].
    gi_ref[...] = (
        jnp.dot(x_ref[...], wi_ref[...], preferred_element_type=jnp.float32)
        + b_ref[0:1, :])

    wh = wh_ref[...]                                             # resident weights
    bhh = jnp.broadcast_to(b_ref[1:2, :], (maxb_pad, 3 * H))     # hoisted broadcast

    # ---- serial recurrence --------------------------------------------------
    def step(i, h):
        off = pl.multiple_of(i * maxb_pad, maxb_pad)             # 8-sublane aligned
        gi = gi_ref[pl.ds(off, maxb_pad), :]                     # [maxb_pad, 3H] f32
        att = att_ref[pl.ds(off, maxb_pad), :]                   # [maxb_pad, H]  f32

        gh = jnp.dot(h.astype(wh.dtype), wh,
                     preferred_element_type=jnp.float32) + bhh   # [maxb_pad, 3H]

        rz = jax.nn.sigmoid(gi[:, 0:2 * H] + gh[:, 0:2 * H])     # one EUP pass (r|z)
        r = rz[:, 0:H]
        z = att * rz[:, H:2 * H]                                 # attentional update gate
        n = jnp.tanh(gi[:, 2 * H:3 * H] + r * gh[:, 2 * H:3 * H])
        hy = h + z * (n - h)                                     # == (1-z)*h + z*n

        # Padding rows (x=0, att=0) give z=0 -> hy == h; they are never gathered
        # back and (batch sizes non-increasing) never feed a valid row later.
        # TODO(synk): for H not a multiple of 128 this is a masked partial-lane
        # store; a [n_steps, maxb_pad*H] lane-dense output layout would avoid it.
        out_ref[pl.ds(off, maxb_pad), :] = hy
        return hy

    h_ref[...] = jax.lax.fori_loop(0, chunk, step, h_ref[...], unroll=unroll)


def augru_packed_forward(packed_x, batch_sizes, packed_att, params, hidden_dim,
                         hx=None, matmul_dtype=jnp.bfloat16):
    """Forward of AUGRU over a packed sequence. Returns packed outputs [T_total, H].

    batch_sizes must be host-static (non-increasing, as produced by
    pack_padded_sequence).  hx is an optional [max_batch, H] initial state.
    """
    wih, whh, bih, bhh = params                   # [3H, D], [3H, H], [3H], [3H]
    T_total, D = packed_x.shape
    H = hidden_dim

    bs = np.asarray(batch_sizes, dtype=np.int64)
    assert bs.ndim == 1 and bs.size > 0
    assert np.all(bs[:-1] >= bs[1:]), "batch_sizes of a packed sequence must be non-increasing"
    assert int(bs.sum()) == T_total

    n_steps = len(bs)
    maxb = int(bs[0])
    maxb_pad = _round_up(maxb, 8)                 # aligned per-step row stride

    # ---- chunk size from a VMEM byte budget (lane-padded, double-buffered
    # streams + single gi scratch).  Conservative enough for v7x's 64 MiB VMEM;
    # v5e/v6e simply get the same (already large) chunk.
    lane = 128
    io_bytes = jnp.dtype(matmul_dtype).itemsize
    bytes_per_step = maxb_pad * (
        2 * _round_up(D, lane) * io_bytes          # x chunk   (double-buffered)
        + 2 * _round_up(H, lane) * 4               # att chunk (double-buffered)
        + 2 * _round_up(H, lane) * 4               # out chunk (double-buffered)
        + _round_up(3 * H, lane) * 4)              # gi scratch (single)
    vmem_budget = 8 * 1024 * 1024
    chunk = int(max(2, min(n_steps, vmem_budget // max(1, bytes_per_step))))
    if (chunk * maxb_pad) % 16:                    # bf16 sublane tiling of the x block
        chunk += 1
    n_chunks = -(-n_steps // chunk)
    n_steps_pad = n_chunks * chunk
    T_pad = n_steps_pad * maxb_pad
    rows_per_chunk = chunk * maxb_pad

    # ---- host-side re-layout: step t, intra-step row i -> padded row t*maxb_pad + i.
    packed_x = jnp.asarray(packed_x)
    packed_att = jnp.asarray(packed_att).reshape(T_total, 1).astype(jnp.float32)
    att_b = jnp.broadcast_to(packed_att, (T_total, H))       # lane-dense attention
    x_io = packed_x.astype(matmul_dtype)

    uniform = (maxb == maxb_pad) and bool(np.all(bs == maxb))
    if uniform:
        # Packed layout is already step-major and 8-aligned: just pad the tail,
        # no scatter/gather HBM round-trip.
        pad = T_pad - T_total
        x_pad = jnp.pad(x_io, ((0, pad), (0, 0)))
        att_pad = jnp.pad(att_b, ((0, pad), (0, 0)))
        row_idx = None
    else:
        # TODO(synk): for very long ragged sequences, move this scatter/gather
        # into the kernel via scalar-prefetched per-step row offsets in SMEM.
        row_idx = np.concatenate(
            [t * maxb_pad + np.arange(int(bs[t])) for t in range(n_steps)]).astype(np.int32)
        row_idx = jnp.asarray(row_idx)
        x_pad = jnp.zeros((T_pad, D), matmul_dtype).at[row_idx].set(x_io)
        att_pad = jnp.zeros((T_pad, H), jnp.float32).at[row_idx].set(att_b)

    # ---- parameters: W^T with gate columns [r | z | n]; biases stacked [2, 3H].
    wi_t = jnp.asarray(wih, jnp.float32).T.astype(matmul_dtype)   # [D, 3H]
    wh_t = jnp.asarray(whh, jnp.float32).T.astype(matmul_dtype)   # [H, 3H]
    b_all = jnp.stack([jnp.asarray(bih, jnp.float32),
                       jnp.asarray(bhh, jnp.float32)], axis=0)    # [2, 3H]

    if hx is None:
        hx_pad = jnp.zeros((maxb_pad, H), jnp.float32)
    else:
        hx = jnp.asarray(hx, jnp.float32)
        hx_pad = jnp.zeros((maxb_pad, H), jnp.float32).at[:maxb, :].set(hx[:maxb])

    kernel = functools.partial(_augru_kernel, chunk=chunk, maxb_pad=maxb_pad,
                               hidden_dim=H, unroll=int(min(8, chunk)))

    out_pad = pl.pallas_call(
        kernel,
        out_shape=jax.ShapeDtypeStruct((T_pad, H), jnp.float32),
        grid_spec=pltpu.PrefetchScalarGridSpec(
            num_scalar_prefetch=0,
            grid=(n_chunks,),
            in_specs=[
                pl.BlockSpec((rows_per_chunk, D), lambda c: (c, 0)),   # x chunk
                pl.BlockSpec((rows_per_chunk, H), lambda c: (c, 0)),   # att chunk
                pl.BlockSpec(memory_space=pl.ANY),                     # W_i^T (HBM)
                pl.BlockSpec(memory_space=pl.ANY),                     # W_h^T (HBM)
                pl.BlockSpec(memory_space=pl.ANY),                     # biases (HBM)
                pl.BlockSpec(memory_space=pl.ANY),                     # hx     (HBM)
            ],
            out_specs=pl.BlockSpec((rows_per_chunk, H), lambda c: (c, 0)),
            scratch_shapes=[
                pltpu.VMEM((maxb_pad, H), jnp.float32),                # carried h
                pltpu.VMEM((rows_per_chunk, 3 * H), jnp.float32),      # chunk gi
                pltpu.VMEM((D, 3 * H), matmul_dtype),                  # W_i^T resident
                pltpu.VMEM((H, 3 * H), matmul_dtype),                  # W_h^T resident
                pltpu.VMEM((2, 3 * H), jnp.float32),                   # biases resident
            ],
        ),
        compiler_params=pltpu.CompilerParams(
            dimension_semantics=("arbitrary",),        # recurrence: sequential grid
            vmem_limit_bytes=48 * 1024 * 1024),
    )(x_pad, att_pad, wi_t, wh_t, b_all, hx_pad)

    if uniform:
        return out_pad[:T_total]
    return out_pad[row_idx]


def _ref_augru_numpy(x, batch_sizes, att, wih, whh, bih, bhh, H, hx=None):
    """Pure-numpy reference mirroring the PyTorch AUGRU forward loop."""
    def sigmoid(v):
        return 1.0 / (1.0 + np.exp(-v))

    maxb = int(batch_sizes[0])
    hx_cur = np.zeros((maxb, H), np.float32) if hx is None else np.asarray(hx, np.float32)
    out = np.zeros((x.shape[0], H), np.float32)
    begin = 0
    for b in batch_sizes:
        b = int(b)
        xi = x[begin:begin + b]
        wi = att[begin:begin + b]
        h = hx_cur[:b]
        gi = xi @ wih.T + bih
        gh = h @ whh.T + bhh
        i_r, i_z, i_n = np.split(gi, 3, axis=1)
        h_r, h_z, h_n = np.split(gh, 3, axis=1)
        r = sigmoid(i_r + h_r)
        z = sigmoid(i_z + h_z)
        n = np.tanh(i_n + r * h_n)
        z = wi * z
        hy = (1.0 - z) * h + z * n
        out[begin:begin + b] = hy
        hx_cur = hy
        begin += b
    return out


if __name__ == "__main__":
    input_dim, hidden_dim = 16, 32

    # Packed sequence: batch of 8 sequences with non-increasing per-step batch sizes.
    batch_sizes = np.array([8, 8, 6, 4, 2], dtype=np.int32)   # T_total = 28
    T_total = int(batch_sizes.sum())

    key = jax.random.PRNGKey(0)
    k_x, k_att, k_wih, k_whh, k_bih, k_bhh, k_hx = jax.random.split(key, 7)

    packed_x = jax.random.normal(k_x, (T_total, input_dim), jnp.float32)
    packed_att = jax.nn.sigmoid(jax.random.normal(k_att, (T_total, 1), jnp.float32))

    # Deterministic parameter init matching nn.RNNCellBase shapes (num_chunks=3).
    bound = 1.0 / np.sqrt(hidden_dim)
    wih = jax.random.uniform(k_wih, (3 * hidden_dim, input_dim), jnp.float32, -bound, bound)
    whh = jax.random.uniform(k_whh, (3 * hidden_dim, hidden_dim), jnp.float32, -bound, bound)
    bih = jax.random.uniform(k_bih, (3 * hidden_dim,), jnp.float32, -bound, bound)
    bhh = jax.random.uniform(k_bhh, (3 * hidden_dim,), jnp.float32, -bound, bound)
    params = (wih, whh, bih, bhh)

    wih_n, whh_n = np.asarray(wih), np.asarray(whh)
    bih_n, bhh_n = np.asarray(bih), np.asarray(bhh)

    # 1) Ragged packed sequence, f32 matmuls, hx=None -> strict algorithmic check.
    out = jax.block_until_ready(
        augru_packed_forward(packed_x, batch_sizes, packed_att, params,
                             hidden_dim, matmul_dtype=jnp.float32))
    ref = _ref_augru_numpy(np.asarray(packed_x), batch_sizes, np.asarray(packed_att),
                           wih_n, whh_n, bih_n, bhh_n, hidden_dim)
    np.testing.assert_allclose(np.asarray(out), ref, rtol=1e-5, atol=1e-5)

    # 2) Same data, production bf16 matmul path + caller-provided hx.
    #    (bf16 operands, f32 accumulation/elementwise -> looser tolerance.)
    hx0 = 0.1 * jax.random.normal(k_hx, (int(batch_sizes[0]), hidden_dim), jnp.float32)
    out_bf16 = jax.block_until_ready(
        augru_packed_forward(packed_x, batch_sizes, packed_att, params,
                             hidden_dim, hx=hx0, matmul_dtype=jnp.bfloat16))
    ref_hx = _ref_augru_numpy(np.asarray(packed_x), batch_sizes, np.asarray(packed_att),
                              wih_n, whh_n, bih_n, bhh_n, hidden_dim,
                              hx=np.asarray(hx0))
    np.testing.assert_allclose(np.asarray(out_bf16), ref_hx, rtol=5e-2, atol=5e-2)

    # 3) Uniform batch sizes -> exercises the no-scatter fast path.
    bs_u = np.array([8, 8, 8, 8], dtype=np.int32)
    T_u = int(bs_u.sum())
    x_u = jax.random.normal(k_x, (T_u, input_dim), jnp.float32)
    att_u = jax.nn.sigmoid(jax.random.normal(k_att, (T_u, 1), jnp.float32))
    out_u = jax.block_until_ready(
        augru_packed_forward(x_u, bs_u, att_u, params, hidden_dim,
                             matmul_dtype=jnp.float32))
    ref_u = _ref_augru_numpy(np.asarray(x_u), bs_u, np.asarray(att_u),
                             wih_n, whh_n, bih_n, bhh_n, hidden_dim)
    np.testing.assert_allclose(np.asarray(out_u), ref_u, rtol=1e-5, atol=1e-5)

    print("KERNEL_OK")
</pallas_src>

<mosaic_0001>
module attributes {stable_mosaic.version = 11 : i64} {
  func.func @_augru_kernel(%arg0: i32, %arg1: memref<48x16xf32, #tpu.memory_space<vmem>>, %arg2: memref<48x32xf32, #tpu.memory_space<vmem>>, %arg3: memref<16x96xf32, #tpu.memory_space<any>>, %arg4: memref<32x96xf32, #tpu.memory_space<any>>, %arg5: memref<2x96xf32, #tpu.memory_space<any>>, %arg6: memref<8x32xf32, #tpu.memory_space<any>>, %arg7: memref<48x32xf32, #tpu.memory_space<vmem>>, %arg8: memref<8x32xf32, #tpu.memory_space<vmem>>, %arg9: memref<48x96xf32, #tpu.memory_space<vmem>>, %arg10: memref<16x96xf32, #tpu.memory_space<vmem>>, %arg11: memref<32x96xf32, #tpu.memory_space<vmem>>, %arg12: memref<2x96xf32, #tpu.memory_space<vmem>>) attributes {dimension_semantics = [#tpu.dimension_semantics<arbitrary>], iteration_bounds = array<i64: 1>, scalar_prefetch = 0 : i64, scratch_operands = 5 : i64, tpu.core_type = #tpu.core_type<tc>, window_params = [{transform_indices = @transform_0, window_bounds = array<i64: 48, 16>}, {transform_indices = @transform_1, window_bounds = array<i64: 48, 32>}, {}, {}, {}, {}, {transform_indices = @transform_6, window_bounds = array<i64: 48, 32>}]} {
    %c0_i32 = arith.constant 0 : i32
    %0 = arith.cmpi eq, %arg0, %c0_i32 : i32
    %1 = arith.extui %0 : i1 to i32
    %c0_i32_0 = arith.constant 0 : i32
    %2 = arith.cmpi ne, %1, %c0_i32_0 : i32
    scf.if %2 {
      "tpu.region"() ({
        %190 = tpu.sem_alloc : memref<!tpu.dma_semaphore, #tpu.memory_space<semaphore_mem>>
        tpu.enqueue_dma source(%arg3 : memref<16x96xf32, #tpu.memory_space<any>>) target(%arg10 : memref<16x96xf32, #tpu.memory_space<vmem>>) target_semaphore(%190 : memref<!tpu.dma_semaphore, #tpu.memory_space<semaphore_mem>>)
        tpu.wait_dma2 semaphore(%190 : memref<!tpu.dma_semaphore, #tpu.memory_space<semaphore_mem>>) src(%arg3 : memref<16x96xf32, #tpu.memory_space<any>>) dst(%arg10 : memref<16x96xf32, #tpu.memory_space<vmem>>)
        tpu.yield
      }) : () -> ()
      "tpu.region"() ({
        %190 = tpu.sem_alloc : memref<!tpu.dma_semaphore, #tpu.memory_space<semaphore_mem>>
        tpu.enqueue_dma source(%arg4 : memref<32x96xf32, #tpu.memory_space<any>>) target(%arg11 : memref<32x96xf32, #tpu.memory_space<vmem>>) target_semaphore(%190 : memref<!tpu.dma_semaphore, #tpu.memory_space<semaphore_mem>>)
        tpu.wait_dma2 semaphore(%190 : memref<!tpu.dma_semaphore, #tpu.memory_space<semaphore_mem>>) src(%arg4 : memref<32x96xf32, #tpu.memory_space<any>>) dst(%arg11 : memref<32x96xf32, #tpu.memory_space<vmem>>)
        tpu.yield
      }) : () -> ()
      "tpu.region"() ({
        %190 = tpu.sem_alloc : memref<!tpu.dma_semaphore, #tpu.memory_space<semaphore_mem>>
        tpu.enqueue_dma source(%arg5 : memref<2x96xf32, #tpu.memory_space<any>>) target(%arg12 : memref<2x96xf32, #tpu.memory_space<vmem>>) target_semaphore(%190 : memref<!tpu.dma_semaphore, #tpu.memory_space<semaphore_mem>>)
        tpu.wait_dma2 semaphore(%190 : memref<!tpu.dma_semaphore, #tpu.memory_space<semaphore_mem>>) src(%arg5 : memref<2x96xf32, #tpu.memory_space<any>>) dst(%arg12 : memref<2x96xf32, #tpu.memory_space<vmem>>)
        tpu.yield
      }) : () -> ()
      "tpu.region"() ({
        %190 = tpu.sem_alloc : memref<!tpu.dma_semaphore, #tpu.memory_space<semaphore_mem>>
        tpu.enqueue_dma source(%arg6 : memref<8x32xf32, #tpu.memory_space<any>>) target(%arg8 : memref<8x32xf32, #tpu.memory_space<vmem>>) target_semaphore(%190 : memref<!tpu.dma_semaphore, #tpu.memory_space<semaphore_mem>>)
        tpu.wait_dma2 semaphore(%190 : memref<!tpu.dma_semaphore, #tpu.memory_space<semaphore_mem>>) src(%arg6 : memref<8x32xf32, #tpu.memory_space<any>>) dst(%arg8 : memref<8x32xf32, #tpu.memory_space<vmem>>)
        tpu.yield
      }) : () -> ()
    } else {
    }
    %c0 = arith.constant 0 : index
    %c0_1 = arith.constant 0 : index
    %3 = vector.load %arg1[%c0, %c0_1] : memref<48x16xf32, #tpu.memory_space<vmem>>, vector<48x16xf32>
    %c0_2 = arith.constant 0 : index
    %c0_3 = arith.constant 0 : index
    %4 = vector.load %arg10[%c0_2, %c0_3] : memref<16x96xf32, #tpu.memory_space<vmem>>, vector<16x96xf32>
    %cst = arith.constant dense<0.000000e+00> : vector<48x96xf32>
    %5 = tpu.matmul %3, %4, %cst {dimension_numbers = #tpu.dot_dimension_numbers<[1], [0], [0], [1], [0, 0, 1, 1], [], []>} : vector<48x16xf32>, vector<16x96xf32>, vector<48x96xf32> -> vector<48x96xf32>
    %c0_4 = arith.constant 0 : index
    %c0_5 = arith.constant 0 : index
    %6 = vector.load %arg12[%c0_4, %c0_5] : memref<2x96xf32, #tpu.memory_space<vmem>>, vector<1x96xf32>
    %7 = vector.broadcast %6 : vector<1x96xf32> to vector<48x96xf32>
    %8 = arith.addf %5, %7 : vector<48x96xf32>
    %c0_6 = arith.constant 0 : index
    %c0_7 = arith.constant 0 : index
    %9 = vector.load %arg9[%c0_6, %c0_7] : memref<48x96xf32, #tpu.memory_space<vmem>>, vector<48x96xf32>
    tpu.vector_store %arg9[%c0_6, %c0_7], %8 {strides = array<i32>} : memref<48x96xf32, #tpu.memory_space<vmem>>, vector<48x96xf32>,
    %c0_8 = arith.constant 0 : index
    %c0_9 = arith.constant 0 : index
    %10 = vector.load %arg11[%c0_8, %c0_9] : memref<32x96xf32, #tpu.memory_space<vmem>>, vector<32x96xf32>
    %c1 = arith.constant 1 : index
    %c0_10 = arith.constant 0 : index
    %11 = vector.load %arg12[%c1, %c0_10] : memref<2x96xf32, #tpu.memory_space<vmem>>, vector<1x96xf32>
    %12 = vector.shape_cast %11 : vector<1x96xf32> to vector<1x96xf32>
    %13 = vector.broadcast %12 : vector<1x96xf32> to vector<8x96xf32>
    %c0_11 = arith.constant 0 : index
    %c0_12 = arith.constant 0 : index
    %14 = vector.load %arg8[%c0_11, %c0_12] : memref<8x32xf32, #tpu.memory_space<vmem>>, vector<8x32xf32>
    %c0_i32_13 = arith.constant 0 : i32
    %c8_i32 = arith.constant 8 : i32
    %15 = arith.muli %c0_i32_13, %c8_i32 : i32
    %16 = tpu.assume_multiple %15, 8 : i32
    %17 = arith.index_cast %16 : i32 to index
    %c0_14 = arith.constant 0 : index
    %18 = vector.load %arg9[%17, %c0_14] : memref<48x96xf32, #tpu.memory_space<vmem>>, vector<8x96xf32>
    %19 = arith.index_cast %16 : i32 to index
    %c0_15 = arith.constant 0 : index
    %20 = vector.load %arg2[%19, %c0_15] : memref<48x32xf32, #tpu.memory_space<vmem>>, vector<8x32xf32>
    %cst_16 = arith.constant dense<0.000000e+00> : vector<8x96xf32>
    %21 = tpu.matmul %14, %10, %cst_16 {dimension_numbers = #tpu.dot_dimension_numbers<[1], [0], [0], [1], [0, 0, 1, 1], [], []>} : vector<8x32xf32>, vector<32x96xf32>, vector<8x96xf32> -> vector<8x96xf32>
    %22 = arith.addf %21, %13 : vector<8x96xf32>
    %23 = vector.extract_strided_slice %18 {offsets = [0, 0], sizes = [8, 64], strides = [1, 1]} : vector<8x96xf32> to vector<8x64xf32>
    %24 = vector.extract_strided_slice %22 {offsets = [0, 0], sizes = [8, 64], strides = [1, 1]} : vector<8x96xf32> to vector<8x64xf32>
    %25 = arith.addf %23, %24 : vector<8x64xf32>
    %26 = arith.negf %25 : vector<8x64xf32>
    %27 = math.exp %26 : vector<8x64xf32>
    %cst_17 = arith.constant 1.000000e+00 : f32
    %28 = vector.broadcast %cst_17 : f32 to vector<8x64xf32>
    %29 = arith.addf %28, %27 : vector<8x64xf32>
    %30 = arith.divf %28, %29 : vector<8x64xf32>
    %31 = vector.extract_strided_slice %30 {offsets = [0, 0], sizes = [8, 32], strides = [1, 1]} : vector<8x64xf32> to vector<8x32xf32>
    %32 = vector.extract_strided_slice %30 {offsets = [0, 32], sizes = [8, 32], strides = [1, 1]} : vector<8x64xf32> to vector<8x32xf32>
    %33 = arith.mulf %20, %32 : vector<8x32xf32>
    %34 = vector.extract_strided_slice %18 {offsets = [0, 64], sizes = [8, 32], strides = [1, 1]} : vector<8x96xf32> to vector<8x32xf32>
    %35 = vector.extract_strided_slice %22 {offsets = [0, 64], sizes = [8, 32], strides = [1, 1]} : vector<8x96xf32> to vector<8x32xf32>
    %36 = arith.mulf %31, %35 : vector<8x32xf32>
    %37 = arith.addf %34, %36 : vector<8x32xf32>
    %38 = math.tanh %37 : vector<8x32xf32>
    %39 = arith.subf %38, %14 : vector<8x32xf32>
    %40 = arith.mulf %33, %39 : vector<8x32xf32>
    %41 = arith.addf %14, %40 : vector<8x32xf32>
    %42 = arith.index_cast %16 : i32 to index
    %c0_18 = arith.constant 0 : index
    %43 = vector.load %arg7[%42, %c0_18] : memref<48x32xf32, #tpu.memory_space<vmem>>, vector<8x32xf32>
    tpu.vector_store %arg7[%42, %c0_18], %41 {strides = array<i32>} : memref<48x32xf32, #tpu.memory_space<vmem>>, vector<8x32xf32>,
    %c1_i32 = arith.constant 1 : i32
    %c8_i32_19 = arith.constant 8 : i32
    %44 = arith.muli %c1_i32, %c8_i32_19 : i32
    %45 = tpu.assume_multiple %44, 8 : i32
    %46 = arith.index_cast %45 : i32 to index
    %c0_20 = arith.constant 0 : index
    %47 = vector.load %arg9[%46, %c0_20] : memref<48x96xf32, #tpu.memory_space<vmem>>, vector<8x96xf32>
    %48 = arith.index_cast %45 : i32 to index
    %c0_21 = arith.constant 0 : index
    %49 = vector.load %arg2[%48, %c0_21] : memref<48x32xf32, #tpu.memory_space<vmem>>, vector<8x32xf32>
    %cst_22 = arith.constant dense<0.000000e+00> : vector<8x96xf32>
    %50 = tpu.matmul %41, %10, %cst_22 {dimension_numbers = #tpu.dot_dimension_numbers<[1], [0], [0], [1], [0, 0, 1, 1], [], []>} : vector<8x32xf32>, vector<32x96xf32>, vector<8x96xf32> -> vector<8x96xf32>
    %51 = arith.addf %50, %13 : vector<8x96xf32>
    %52 = vector.extract_strided_slice %47 {offsets = [0, 0], sizes = [8, 64], strides = [1, 1]} : vector<8x96xf32> to vector<8x64xf32>
    %53 = vector.extract_strided_slice %51 {offsets = [0, 0], sizes = [8, 64], strides = [1, 1]} : vector<8x96xf32> to vector<8x64xf32>
    %54 = arith.addf %52, %53 : vector<8x64xf32>
    %55 = arith.negf %54 : vector<8x64xf32>
    %56 = math.exp %55 : vector<8x64xf32>
    %cst_23 = arith.constant 1.000000e+00 : f32
    %57 = vector.broadcast %cst_23 : f32 to vector<8x64xf32>
    %58 = arith.addf %57, %56 : vector<8x64xf32>
    %59 = arith.divf %57, %58 : vector<8x64xf32>
    %60 = vector.extract_strided_slice %59 {offsets = [0, 0], sizes = [8, 32], strides = [1, 1]} : vector<8x64xf32> to vector<8x32xf32>
    %61 = vector.extract_strided_slice %59 {offsets = [0, 32], sizes = [8, 32], strides = [1, 1]} : vector<8x64xf32> to vector<8x32xf32>
    %62 = arith.mulf %49, %61 : vector<8x32xf32>
    %63 = vector.extract_strided_slice %47 {offsets = [0, 64], sizes = [8, 32], strides = [1, 1]} : vector<8x96xf32> to vector<8x32xf32>
    %64 = vector.extract_strided_slice %51 {offsets = [0, 64], sizes = [8, 32], strides = [1, 1]} : vector<8x96xf32> to vector<8x32xf32>
    %65 = arith.mulf %60, %64 : vector<8x32xf32>
    %66 = arith.addf %63, %65 : vector<8x32xf32>
    %67 = math.tanh %66 : vector<8x32xf32>
    %68 = arith.subf %67, %41 : vector<8x32xf32>
    %69 = arith.mulf %62, %68 : vector<8x32xf32>
    %70 = arith.addf %41, %69 : vector<8x32xf32>
    %71 = arith.index_cast %45 : i32 to index
    %c0_24 = arith.constant 0 : index
    %72 = vector.load %arg7[%71, %c0_24] : memref<48x32xf32, #tpu.memory_space<vmem>>, vector<8x32xf32>
    tpu.vector_store %arg7[%71, %c0_24], %70 {strides = array<i32>} : memref<48x32xf32, #tpu.memory_space<vmem>>, vector<8x32xf32>,
    %c2_i32 = arith.constant 2 : i32
    %c8_i32_25 = arith.constant 8 : i32
    %73 = arith.muli %c2_i32, %c8_i32_25 : i32
    %74 = tpu.assume_multiple %73, 8 : i32
    %75 = arith.index_cast %74 : i32 to index
    %c0_26 = arith.constant 0 : index
    %76 = vector.load %arg9[%75, %c0_26] : memref<48x96xf32, #tpu.memory_space<vmem>>, vector<8x96xf32>
    %77 = arith.index_cast %74 : i32 to index
    %c0_27 = arith.constant 0 : index
    %78 = vector.load %arg2[%77, %c0_27] : memref<48x32xf32, #tpu.memory_space<vmem>>, vector<8x32xf32>
    %cst_28 = arith.constant dense<0.000000e+00> : vector<8x96xf32>
    %79 = tpu.matmul %70, %10, %cst_28 {dimension_numbers = #tpu.dot_dimension_numbers<[1], [0], [0], [1], [0, 0, 1, 1], [], []>} : vector<8x32xf32>, vector<32x96xf32>, vector<8x96xf32> -> vector<8x96xf32>
    %80 = arith.addf %79, %13 : vector<8x96xf32>
    %81 = vector.extract_strided_slice %76 {offsets = [0, 0], sizes = [8, 64], strides = [1, 1]} : vector<8x96xf32> to vector<8x64xf32>
    %82 = vector.extract_strided_slice %80 {offsets = [0, 0], sizes = [8, 64], strides = [1, 1]} : vector<8x96xf32> to vector<8x64xf32>
    %83 = arith.addf %81, %82 : vector<8x64xf32>
    %84 = arith.negf %83 : vector<8x64xf32>
    %85 = math.exp %84 : vector<8x64xf32>
    %cst_29 = arith.constant 1.000000e+00 : f32
    %86 = vector.broadcast %cst_29 : f32 to vector<8x64xf32>
    %87 = arith.addf %86, %85 : vector<8x64xf32>
    %88 = arith.divf %86, %87 : vector<8x64xf32>
    %89 = vector.extract_strided_slice %88 {offsets = [0, 0], sizes = [8, 32], strides = [1, 1]} : vector<8x64xf32> to vector<8x32xf32>
    %90 = vector.extract_strided_slice %88 {offsets = [0, 32], sizes = [8, 32], strides = [1, 1]} : vector<8x64xf32> to vector<8x32xf32>
    %91 = arith.mulf %78, %90 : vector<8x32xf32>
    %92 = vector.extract_strided_slice %76 {offsets = [0, 64], sizes = [8, 32], strides = [1, 1]} : vector<8x96xf32> to vector<8x32xf32>
    %93 = vector.extract_strided_slice %80 {offsets = [0, 64], sizes = [8, 32], strides = [1, 1]} : vector<8x96xf32> to vector<8x32xf32>
    %94 = arith.mulf %89, %93 : vector<8x32xf32>
    %95 = arith.addf %92, %94 : vector<8x32xf32>
    %96 = math.tanh %95 : vector<8x32xf32>
    %97 = arith.subf %96, %70 : vector<8x32xf32>
    %98 = arith.mulf %91, %97 : vector<8x32xf32>
    %99 = arith.addf %70, %98 : vector<8x32xf32>
    %100 = arith.index_cast %74 : i32 to index
    %c0_30 = arith.constant 0 : index
    %101 = vector.load %arg7[%100, %c0_30] : memref<48x32xf32, #tpu.memory_space<vmem>>, vector<8x32xf32>
    tpu.vector_store %arg7[%100, %c0_30], %99 {strides = array<i32>} : memref<48x32xf32, #tpu.memory_space<vmem>>, vector<8x32xf32>,
    %c3_i32 = arith.constant 3 : i32
    %c8_i32_31 = arith.constant 8 : i32
    %102 = arith.muli %c3_i32, %c8_i32_31 : i32
    %103 = tpu.assume_multiple %102, 8 : i32
    %104 = arith.index_cast %103 : i32 to index
    %c0_32 = arith.constant 0 : index
    %105 = vector.load %arg9[%104, %c0_32] : memref<48x96xf32, #tpu.memory_space<vmem>>, vector<8x96xf32>
    %106 = arith.index_cast %103 : i32 to index
    %c0_33 = arith.constant 0 : index
    %107 = vector.load %arg2[%106, %c0_33] : memref<48x32xf32, #tpu.memory_space<vmem>>, vector<8x32xf32>
    %cst_34 = arith.constant dense<0.000000e+00> : vector<8x96xf32>
    %108 = tpu.matmul %99, %10, %cst_34 {dimension_numbers = #tpu.dot_dimension_numbers<[1], [0], [0], [1], [0, 0, 1, 1], [], []>} : vector<8x32xf32>, vector<32x96xf32>, vector<8x96xf32> -> vector<8x96xf32>
    %109 = arith.addf %108, %13 : vector<8x96xf32>
    %110 = vector.extract_strided_slice %105 {offsets = [0, 0], sizes = [8, 64], strides = [1, 1]} : vector<8x96xf32> to vector<8x64xf32>
    %111 = vector.extract_strided_slice %109 {offsets = [0, 0], sizes = [8, 64], strides = [1, 1]} : vector<8x96xf32> to vector<8x64xf32>
    %112 = arith.addf %110, %111 : vector<8x64xf32>
    %113 = arith.negf %112 : vector<8x64xf32>
    %114 = math.exp %113 : vector<8x64xf32>
    %cst_35 = arith.constant 1.000000e+00 : f32
    %115 = vector.broadcast %cst_35 : f32 to vector<8x64xf32>
    %116 = arith.addf %115, %114 : vector<8x64xf32>
    %117 = arith.divf %115, %116 : vector<8x64xf32>
    %118 = vector.extract_strided_slice %117 {offsets = [0, 0], sizes = [8, 32], strides = [1, 1]} : vector<8x64xf32> to vector<8x32xf32>
    %119 = vector.extract_strided_slice %117 {offsets = [0, 32], sizes = [8, 32], strides = [1, 1]} : vector<8x64xf32> to vector<8x32xf32>
    %120 = arith.mulf %107, %119 : vector<8x32xf32>
    %121 = vector.extract_strided_slice %105 {offsets = [0, 64], sizes = [8, 32], strides = [1, 1]} : vector<8x96xf32> to vector<8x32xf32>
    %122 = vector.extract_strided_slice %109 {offsets = [0, 64], sizes = [8, 32], strides = [1, 1]} : vector<8x96xf32> to vector<8x32xf32>
    %123 = arith.mulf %118, %122 : vector<8x32xf32>
    %124 = arith.addf %121, %123 : vector<8x32xf32>
    %125 = math.tanh %124 : vector<8x32xf32>
    %126 = arith.subf %125, %99 : vector<8x32xf32>
    %127 = arith.mulf %120, %126 : vector<8x32xf32>
    %128 = arith.addf %99, %127 : vector<8x32xf32>
    %129 = arith.index_cast %103 : i32 to index
    %c0_36 = arith.constant 0 : index
    %130 = vector.load %arg7[%129, %c0_36] : memref<48x32xf32, #tpu.memory_space<vmem>>, vector<8x32xf32>
    tpu.vector_store %arg7[%129, %c0_36], %128 {strides = array<i32>} : memref<48x32xf32, #tpu.memory_space<vmem>>, vector<8x32xf32>,
    %c4_i32 = arith.constant 4 : i32
    %c8_i32_37 = arith.constant 8 : i32
    %131 = arith.muli %c4_i32, %c8_i32_37 : i32
    %132 = tpu.assume_multiple %131, 8 : i32
    %133 = arith.index_cast %132 : i32 to index
    %c0_38 = arith.constant 0 : index
    %134 = vector.load %arg9[%133, %c0_38] : memref<48x96xf32, #tpu.memory_space<vmem>>, vector<8x96xf32>
    %135 = arith.index_cast %132 : i32 to index
    %c0_39 = arith.constant 0 : index
    %136 = vector.load %arg2[%135, %c0_39] : memref<48x32xf32, #tpu.memory_space<vmem>>, vector<8x32xf32>
    %cst_40 = arith.constant dense<0.000000e+00> : vector<8x96xf32>
    %137 = tpu.matmul %128, %10, %cst_40 {dimension_numbers = #tpu.dot_dimension_numbers<[1], [0], [0], [1], [0, 0, 1, 1], [], []>} : vector<8x32xf32>, vector<32x96xf32>, vector<8x96xf32> -> vector<8x96xf32>
    %138 = arith.addf %137, %13 : vector<8x96xf32>
    %139 = vector.extract_strided_slice %134 {offsets = [0, 0], sizes = [8, 64], strides = [1, 1]} : vector<8x96xf32> to vector<8x64xf32>
    %140 = vector.extract_strided_slice %138 {offsets = [0, 0], sizes = [8, 64], strides = [1, 1]} : vector<8x96xf32> to vector<8x64xf32>
    %141 = arith.addf %139, %140 : vector<8x64xf32>
    %142 = arith.negf %141 : vector<8x64xf32>
    %143 = math.exp %142 : vector<8x64xf32>
    %cst_41 = arith.constant 1.000000e+00 : f32
    %144 = vector.broadcast %cst_41 : f32 to vector<8x64xf32>
    %145 = arith.addf %144, %143 : vector<8x64xf32>
    %146 = arith.divf %144, %145 : vector<8x64xf32>
    %147 = vector.extract_strided_slice %146 {offsets = [0, 0], sizes = [8, 32], strides = [1, 1]} : vector<8x64xf32> to vector<8x32xf32>
    %148 = vector.extract_strided_slice %146 {offsets = [0, 32], sizes = [8, 32], strides = [1, 1]} : vector<8x64xf32> to vector<8x32xf32>
    %149 = arith.mulf %136, %148 : vector<8x32xf32>
    %150 = vector.extract_strided_slice %134 {offsets = [0, 64], sizes = [8, 32], strides = [1, 1]} : vector<8x96xf32> to vector<8x32xf32>
    %151 = vector.extract_strided_slice %138 {offsets = [0, 64], sizes = [8, 32], strides = [1, 1]} : vector<8x96xf32> to vector<8x32xf32>
    %152 = arith.mulf %147, %151 : vector<8x32xf32>
    %153 = arith.addf %150, %152 : vector<8x32xf32>
    %154 = math.tanh %153 : vector<8x32xf32>
    %155 = arith.subf %154, %128 : vector<8x32xf32>
    %156 = arith.mulf %149, %155 : vector<8x32xf32>
    %157 = arith.addf %128, %156 : vector<8x32xf32>
    %158 = arith.index_cast %132 : i32 to index
    %c0_42 = arith.constant 0 : index
    %159 = vector.load %arg7[%158, %c0_42] : memref<48x32xf32, #tpu.memory_space<vmem>>, vector<8x32xf32>
    tpu.vector_store %arg7[%158, %c0_42], %157 {strides = array<i32>} : memref<48x32xf32, #tpu.memory_space<vmem>>, vector<8x32xf32>,
    %c5_i32 = arith.constant 5 : i32
    %c8_i32_43 = arith.constant 8 : i32
    %160 = arith.muli %c5_i32, %c8_i32_43 : i32
    %161 = tpu.assume_multiple %160, 8 : i32
    %162 = arith.index_cast %161 : i32 to index
    %c0_44 = arith.constant 0 : index
    %163 = vector.load %arg9[%162, %c0_44] : memref<48x96xf32, #tpu.memory_space<vmem>>, vector<8x96xf32>
    %164 = arith.index_cast %161 : i32 to index
    %c0_45 = arith.constant 0 : index
    %165 = vector.load %arg2[%164, %c0_45] : memref<48x32xf32, #tpu.memory_space<vmem>>, vector<8x32xf32>
    %cst_46 = arith.constant dense<0.000000e+00> : vector<8x96xf32>
    %166 = tpu.matmul %157, %10, %cst_46 {dimension_numbers = #tpu.dot_dimension_numbers<[1], [0], [0], [1], [0, 0, 1, 1], [], []>} : vector<8x32xf32>, vector<32x96xf32>, vector<8x96xf32> -> vector<8x96xf32>
    %167 = arith.addf %166, %13 : vector<8x96xf32>
    %168 = vector.extract_strided_slice %163 {offsets = [0, 0], sizes = [8, 64], strides = [1, 1]} : vector<8x96xf32> to vector<8x64xf32>
    %169 = vector.extract_strided_slice %167 {offsets = [0, 0], sizes = [8, 64], strides = [1, 1]} : vector<8x96xf32> to vector<8x64xf32>
    %170 = arith.addf %168, %169 : vector<8x64xf32>
    %171 = arith.negf %170 : vector<8x64xf32>
    %172 = math.exp %171 : vector<8x64xf32>
    %cst_47 = arith.constant 1.000000e+00 : f32
    %173 = vector.broadcast %cst_47 : f32 to vector<8x64xf32>
    %174 = arith.addf %173, %172 : vector<8x64xf32>
    %175 = arith.divf %173, %174 : vector<8x64xf32>
    %176 = vector.extract_strided_slice %175 {offsets = [0, 0], sizes = [8, 32], strides = [1, 1]} : vector<8x64xf32> to vector<8x32xf32>
    %177 = vector.extract_strided_slice %175 {offsets = [0, 32], sizes = [8, 32], strides = [1, 1]} : vector<8x64xf32> to vector<8x32xf32>
    %178 = arith.mulf %165, %177 : vector<8x32xf32>
    %179 = vector.extract_strided_slice %163 {offsets = [0, 64], sizes = [8, 32], strides = [1, 1]} : vector<8x96xf32> to vector<8x32xf32>
    %180 = vector.extract_strided_slice %167 {offsets = [0, 64], sizes = [8, 32], strides = [1, 1]} : vector<8x96xf32> to vector<8x32xf32>
    %181 = arith.mulf %176, %180 : vector<8x32xf32>
    %182 = arith.addf %179, %181 : vector<8x32xf32>
    %183 = math.tanh %182 : vector<8x32xf32>
    %184 = arith.subf %183, %157 : vector<8x32xf32>
    %185 = arith.mulf %178, %184 : vector<8x32xf32>
    %186 = arith.addf %157, %185 : vector<8x32xf32>
    %187 = arith.index_cast %161 : i32 to index
    %c0_48 = arith.constant 0 : index
    %188 = vector.load %arg7[%187, %c0_48] : memref<48x32xf32, #tpu.memory_space<vmem>>, vector<8x32xf32>
    tpu.vector_store %arg7[%187, %c0_48], %186 {strides = array<i32>} : memref<48x32xf32, #tpu.memory_space<vmem>>, vector<8x32xf32>,
    %c6_i32 = arith.constant 6 : i32
    %c0_49 = arith.constant 0 : index
    %c0_50 = arith.constant 0 : index
    %189 = vector.load %arg8[%c0_49, %c0_50] : memref<8x32xf32, #tpu.memory_space<vmem>>, vector<8x32xf32>
    tpu.vector_store %arg8[%c0_49, %c0_50], %186 {strides = array<i32>} : memref<8x32xf32, #tpu.memory_space<vmem>>, vector<8x32xf32>,
    return
  }
  func.func @transform_0(%arg0: i32) -> (i32, i32) {
    %c0_i32 = arith.constant 0 : i32
    %c0_i32_0 = arith.constant 0 : i32
    return %arg0, %c0_i32 : i32, i32
  }
  func.func @transform_1(%arg0: i32) -> (i32, i32) {
    %c0_i32 = arith.constant 0 : i32
    %c0_i32_0 = arith.constant 0 : i32
    return %arg0, %c0_i32 : i32, i32
  }
  func.func @transform_6(%arg0: i32) -> (i32, i32) {
    %c0_i32 = arith.constant 0 : i32
    %c0_i32_0 = arith.constant 0 : i32
    return %arg0, %c0_i32 : i32, i32
  }
}

</mosaic_0001>

<llo_original>
// kernel: tpu_custom_call.1
$region0: #{tpu_custom_call.1}
  #allocation0 [shape = 'u32[]', space=smem, size = 0x4, offset = 0x4, fixed_abs, tag = 'smem constant byte address 0x4 - core index']
  #allocation1 [shape = 'u32[72,128]{1,0:T(1,128)}', space=vmem, size = 0x9000, scoped, tag = 'internal scratch']
  #allocation2 [shape = 'f32[8,32]{1,0:T(8,128)}', space=vmem, size = 0x1000, scoped, tag = 'scratch operand']
  #allocation3 [shape = 'f32[48,96]{1,0:T(8,128)}', space=vmem, size = 0x6000, scoped, tag = 'scratch operand']
  #allocation4 [shape = 'f32[16,96]{1,0:T(8,128)}', space=vmem, size = 0x2000, scoped, tag = 'scratch operand']
  #allocation5 [shape = 'f32[32,96]{1,0:T(8,128)}', space=vmem, size = 0x4000, scoped, tag = 'scratch operand']
  #allocation6 [shape = 'f32[2,96]{1,0:T(2,128)}', space=vmem, size = 0x400, scoped, tag = 'scratch operand']
  #allocation8 [shape = 's32[]', space=sflag, size = 0x4, offset = 0, fixed_abs, tag = 'sflag constant byte address 0x0 - dummy sync flag']
  #allocation10 [shape = 's32[]', space=sflag, size = 0x4, offset = 0, fixed_abs, tag = 'sflag constant byte address 0x0 - dummy sync flag']
  #allocation12 [shape = 's32[]', space=sflag, size = 0x4, offset = 0, fixed_abs, tag = 'sflag constant byte address 0x0 - dummy sync flag']
  #allocation14 [shape = 's32[]', space=sflag, size = 0x4, offset = 0, fixed_abs, tag = 'sflag constant byte address 0x0 - dummy sync flag']
  %s0 = inlined_call_operand.vmem [shape: f32[48,16], index: 0, kind: input, shape index: {}]
  %s1 = inlined_call_operand.vmem [shape: f32[48,32], index: 1, kind: input, shape index: {}]
  %s2 = inlined_call_operand.vmem [shape: f32[16,96], index: 2, kind: input, shape index: {}]
  %s3 = inlined_call_operand.vmem [shape: f32[32,96], index: 3, kind: input, shape index: {}]
  %s4 = inlined_call_operand.vmem [shape: f32[2,96], index: 4, kind: input, shape index: {}]
  %s5 = inlined_call_operand.vmem [shape: f32[8,32], index: 5, kind: input, shape index: {}]
  %s6 = inlined_call_operand.vmem [shape: f32[48,32], index: 6, kind: output, shape index: {}]
  %s7 = sld [smem:[#allocation0]]
  $region128: #{tpu_custom_call.1} parent=0
    _
  %s9 = ssub.s32 1, %s7
  %s10 = scalar_select 0, %s9, %s7
  // Predicated region
  $region2: #{tpu_custom_call.1} parent=0 // pred_check
    _
  $region3: #{tpu_custom_call.1} parent=0 // pred_check_branch
    %12 = sbr.rel (0) target = $region5
  $region4: #{tpu_custom_call.1} parent=0 // pred_region
    _
  $region5: #{tpu_custom_call.1} parent=0 // pred_fallthru
    _
  // Predicated region
  $region6: #{tpu_custom_call.1} parent=0 // pred_check
    _
  $region7: #{tpu_custom_call.1} parent=0 // pred_check_branch
    %14 = sbr.rel (0) target = $region9
  $region8: #{tpu_custom_call.1} parent=0 // pred_region
    _
  $region9: #{tpu_custom_call.1} parent=0 // pred_fallthru
    _
  %p15 = scmp.eq.s32.totalorder 0, 0
  // Predicated region
  $region10: #{tpu_custom_call.1} parent=0 // pred_check
    %p16 = pneg %p15
  $region11: #{tpu_custom_call.1} parent=0 // pred_check_branch
    %18 = sbr.rel (%p16) target = $region13
  $region12: #{tpu_custom_call.1} parent=0 // pred_region
    $region14: #{tpu_custom_call.1} parent=12
      #allocation7 [shape = 's32[1]{0}', space=sflag, size = 0x4, scoped, tag = 'scoped memory for tpu_custom_call.1']
      // Predicated region
      $region15: #{tpu_custom_call.1} parent=14 // pred_check
        _
      $region16: #{tpu_custom_call.1} parent=14 // pred_check_branch
        %20 = sbr.rel (0) target = $region18
      $region17: #{tpu_custom_call.1} parent=14 // pred_region
        loop: start=0, step=1, limit=1
        $region19: #{tpu_custom_call.1} parent=17 // loop_pre_header
          _
        $region20: #{tpu_custom_call.1} parent=17 // loop_header
          %s22 = sphi 0, %s26
          %p23 = scmp.ge.s32.totalorder %s22, 1
          %s27 = sphi %s2, %s2
          %s28 = sphi [#allocation4], [#allocation4]
        $region21: #{tpu_custom_call.1} parent=17 // loop_header_branch
          %25 = sbr.rel (%p23) target = $region25
        $region22: #{tpu_custom_call.1} parent=17 // loop_body
          %v29 = vld [vmem:[%s27] sm:$0xff]
          %30 = vst [vmem:[%s28] sm:$0xff] %v29
          %v31 = vld [vmem:[%s27 + $0x8] sm:$0xff]
          %32 = vst [vmem:[%s28 + $0x8] sm:$0xff] %v31
        $region23: #{tpu_custom_call.1} parent=17 // loop_footer
          %s26 = sadd.s32 1, %s22
        $region24: #{tpu_custom_call.1} parent=17 // loop_footer_branch
          %21 = sbr.rel target = $region20
        $region25: #{tpu_custom_call.1} parent=17 // loop_exit
          _
      $region18: #{tpu_custom_call.1} parent=14 // pred_fallthru
        _
      // Predicated region
      $region26: #{tpu_custom_call.1} parent=14 // pred_check
        _
      $region27: #{tpu_custom_call.1} parent=14 // pred_check_branch
        %34 = sbr.rel target = $region29
      $region28: #{tpu_custom_call.1} parent=14 // pred_region
        _
      $region29: #{tpu_custom_call.1} parent=14 // pred_fallthru
        _
      // Predicated region
      $region30: #{tpu_custom_call.1} parent=14 // pred_check
        _
      $region31: #{tpu_custom_call.1} parent=14 // pred_check_branch
        %37 = sbr.rel (0) target = $region33
      $region32: #{tpu_custom_call.1} parent=14 // pred_region
        %38 = vsyncadd [#allocation7], 256
      $region33: #{tpu_custom_call.1} parent=14 // pred_fallthru
        _
      %s39 = smul.u32 16, 1
      %s40 = sshll.u32 %s39, 4
      %41 = dma.done [#allocation7], %s40
    $region34: #{tpu_custom_call.1} parent=12
      #allocation9 [shape = 's32[1]{0}', space=sflag, size = 0x4, scoped, tag = 'scoped memory for tpu_custom_call.1']
      // Predicated region
      $region35: #{tpu_custom_call.1} parent=34 // pred_check
        _
      $region36: #{tpu_custom_call.1} parent=34 // pred_check_branch
        %43 = sbr.rel (0) target = $region38
      $region37: #{tpu_custom_call.1} parent=34 // pred_region
        loop: start=0, step=1, limit=1
        $region39: #{tpu_custom_call.1} parent=37 // loop_pre_header
          _
        $region40: #{tpu_custom_call.1} parent=37 // loop_header
          %s45 = sphi 0, %s49
          %p46 = scmp.ge.s32.totalorder %s45, 1
          %s50 = sphi %s3, %s3
          %s51 = sphi [#allocation5], [#allocation5]
        $region41: #{tpu_custom_call.1} parent=37 // loop_header_branch
          %48 = sbr.rel (%p46) target = $region45
        $region42: #{tpu_custom_call.1} parent=37 // loop_body
          %v52 = vld [vmem:[%s50] sm:$0xff]
          %53 = vst [vmem:[%s51] sm:$0xff] %v52
          %v54 = vld [vmem:[%s50 + $0x8] sm:$0xff]
          %55 = vst [vmem:[%s51 + $0x8] sm:$0xff] %v54
          %v56 = vld [vmem:[%s50 + $0x10] sm:$0xff]
          %57 = vst [vmem:[%s51 + $0x10] sm:$0xff] %v56
          %v58 = vld [vmem:[%s50 + $0x18] sm:$0xff]
          %59 = vst [vmem:[%s51 + $0x18] sm:$0xff] %v58
        $region43: #{tpu_custom_call.1} parent=37 // loop_footer
          %s49 = sadd.s32 1, %s45
        $region44: #{tpu_custom_call.1} parent=37 // loop_footer_branch
          %44 = sbr.rel target = $region40
        $region45: #{tpu_custom_call.1} parent=37 // loop_exit
          _
      $region38: #{tpu_custom_call.1} parent=34 // pred_fallthru
        _
      // Predicated region
      $region46: #{tpu_custom_call.1} parent=34 // pred_check
        _
      $region47: #{tpu_custom_call.1} parent=34 // pred_check_branch
        %61 = sbr.rel target = $region49
      $region48: #{tpu_custom_call.1} parent=34 // pred_region
        _
      $region49: #{tpu_custom_call.1} parent=34 // pred_fallthru
        _
      // Predicated region
      $region50: #{tpu_custom_call.1} parent=34 // pred_check
        _
      $region51: #{tpu_custom_call.1} parent=34 // pred_check_branch
        %64 = sbr.rel (0) target = $region53
      $region52: #{tpu_custom_call.1} parent=34 // pred_region
        %65 = vsyncadd [#allocation9], 512
      $region53: #{tpu_custom_call.1} parent=34 // pred_fallthru
        _
      %s66 = smul.u32 32, 1
      %s67 = sshll.u32 %s66, 4
      %68 = dma.done [#allocation9], %s67
    $region54: #{tpu_custom_call.1} parent=12
      #allocation11 [shape = 's32[1]{0}', space=sflag, size = 0x4, scoped, tag = 'scoped memory for tpu_custom_call.1']
      // Predicated region
      $region55: #{tpu_custom_call.1} parent=54 // pred_check
        _
      $region56: #{tpu_custom_call.1} parent=54 // pred_check_branch
        %70 = sbr.rel target = $region58
      $region57: #{tpu_custom_call.1} parent=54 // pred_region
        // Predicated region
        $region70: #{tpu_custom_call.1} parent=57 // pred_check
          _
        $region71: #{tpu_custom_call.1} parent=57 // pred_check_branch
          %86 = sbr.rel (0) target = $region73
        $region72: #{tpu_custom_call.1} parent=57 // pred_region
          %s88 = ssub.s32 4, 1
          loop: start=0, step=1, limit=1
          $region74: #{tpu_custom_call.1} parent=72 // loop_pre_header
            _
          $region75: #{tpu_custom_call.1} parent=72 // loop_header
            %s90 = sphi 0, %s94
            %p91 = scmp.ge.s32.totalorder %s90, 1
            %s95 = sphi %s4, %s4
            %s96 = sphi [#allocation6], [#allocation6]
          $region76: #{tpu_custom_call.1} parent=72 // loop_header_branch
            %93 = sbr.rel (%p91) target = $region80
          $region77: #{tpu_custom_call.1} parent=72 // loop_body
            %v97 = vld [vmem:[%s95] sm:%s88]
            %98 = vst [vmem:[%s96] sm:%s88] %v97
          $region78: #{tpu_custom_call.1} parent=72 // loop_footer
            %s94 = sadd.s32 1, %s90
          $region79: #{tpu_custom_call.1} parent=72 // loop_footer_branch
            %89 = sbr.rel target = $region75
          $region80: #{tpu_custom_call.1} parent=72 // loop_exit
            _
        $region73: #{tpu_custom_call.1} parent=57 // pred_fallthru
          _
      $region58: #{tpu_custom_call.1} parent=54 // pred_fallthru
        _
      // Predicated region
      $region59: #{tpu_custom_call.1} parent=54 // pred_check
        _
      $region60: #{tpu_custom_call.1} parent=54 // pred_check_branch
        %72 = sbr.rel (0) target = $region62
      $region61: #{tpu_custom_call.1} parent=54 // pred_region
        %s74 = ssub.s32 4, 1
        loop: start=0, step=1, limit=1
        $region63: #{tpu_custom_call.1} parent=61 // loop_pre_header
          _
        $region64: #{tpu_custom_call.1} parent=61 // loop_header
          %s76 = sphi 0, %s80
          %p77 = scmp.ge.s32.totalorder %s76, 1
          %s81 = sphi %s4, %s4
          %s82 = sphi [#allocation6], [#allocation6]
        $region65: #{tpu_custom_call.1} parent=61 // loop_header_branch
          %79 = sbr.rel (%p77) target = $region69
        $region66: #{tpu_custom_call.1} parent=61 // loop_body
          %v83 = vld [vmem:[%s81] sm:%s74]
          %84 = vst [vmem:[%s82] sm:%s74] %v83
        $region67: #{tpu_custom_call.1} parent=61 // loop_footer
          %s80 = sadd.s32 1, %s76
        $region68: #{tpu_custom_call.1} parent=61 // loop_footer_branch
          %75 = sbr.rel target = $region64
        $region69: #{tpu_custom_call.1} parent=61 // loop_exit
          _
      $region62: #{tpu_custom_call.1} parent=54 // pred_fallthru
        _
      // Predicated region
      $region81: #{tpu_custom_call.1} parent=54 // pred_check
        _
      $region82: #{tpu_custom_call.1} parent=54 // pred_check_branch
        %101 = sbr.rel (0) target = $region84
      $region83: #{tpu_custom_call.1} parent=54 // pred_region
        %102 = vsyncadd [#allocation11], 32
      $region84: #{tpu_custom_call.1} parent=54 // pred_fallthru
        _
      %s103 = smul.u32 2, 1
      %s104 = sshll.u32 %s103, 4
      %105 = dma.done [#allocation11], %s104
    $region85: #{tpu_custom_call.1} parent=12
      #allocation13 [shape = 's32[1]{0}', space=sflag, size = 0x4, scoped, tag = 'scoped memory for tpu_custom_call.1']
      // Predicated region
      $region86: #{tpu_custom_call.1} parent=85 // pred_check
        _
      $region87: #{tpu_custom_call.1} parent=85 // pred_check_branch
        %107 = sbr.rel (0) target = $region89
      $region88: #{tpu_custom_call.1} parent=85 // pred_region
        // Predicated region
        $region101: #{tpu_custom_call.1} parent=88 // pred_check
          _
        $region102: #{tpu_custom_call.1} parent=88 // pred_check_branch
          %123 = sbr.rel (0) target = $region104
        $region103: #{tpu_custom_call.1} parent=88 // pred_region
          loop: start=0, step=1, limit=1
          $region105: #{tpu_custom_call.1} parent=103 // loop_pre_header
            _
          $region106: #{tpu_custom_call.1} parent=103 // loop_header
            %s125 = sphi 0, %s129
            %p126 = scmp.ge.s32.totalorder %s125, 1
            %s130 = sphi %s5, %s5
            %s131 = sphi [#allocation2], [#allocation2]
          $region107: #{tpu_custom_call.1} parent=103 // loop_header_branch
            %128 = sbr.rel (%p126) target = $region111
          $region108: #{tpu_custom_call.1} parent=103 // loop_body
            %v132 = vld [vmem:[%s130] sm:$0xff]
            %133 = vst [vmem:[%s131] sm:$0xff] %v132
          $region109: #{tpu_custom_call.1} parent=103 // loop_footer
            %s129 = sadd.s32 1, %s125
          $region110: #{tpu_custom_call.1} parent=103 // loop_footer_branch
            %124 = sbr.rel target = $region106
          $region111: #{tpu_custom_call.1} parent=103 // loop_exit
            _
        $region104: #{tpu_custom_call.1} parent=88 // pred_fallthru
          _
        // Predicated region
        $region112: #{tpu_custom_call.1} parent=88 // pred_check
          _
        $region113: #{tpu_custom_call.1} parent=88 // pred_check_branch
          %135 = sbr.rel target = $region115
        $region114: #{tpu_custom_call.1} parent=88 // pred_region
          _
        $region115: #{tpu_custom_call.1} parent=88 // pred_fallthru
          _
      $region89: #{tpu_custom_call.1} parent=85 // pred_fallthru
        _
      // Predicated region
      $region90: #{tpu_custom_call.1} parent=85 // pred_check
        _
      $region91: #{tpu_custom_call.1} parent=85 // pred_check_branch
        %109 = sbr.rel target = $region93
      $region92: #{tpu_custom_call.1} parent=85 // pred_region
        %s111 = ssub.s32 256, 1
        loop: start=0, step=1, limit=1
        $region94: #{tpu_custom_call.1} parent=92 // loop_pre_header
          _
        $region95: #{tpu_custom_call.1} parent=92 // loop_header
          %s113 = sphi 0, %s117
          %p114 = scmp.ge.s32.totalorder %s113, 1
          %s118 = sphi %s5, %s5
          %s119 = sphi [#allocation2], [#allocation2]
        $region96: #{tpu_custom_call.1} parent=92 // loop_header_branch
          %116 = sbr.rel (%p114) target = $region100
        $region97: #{tpu_custom_call.1} parent=92 // loop_body
          %v120 = vld [vmem:[%s118] sm:%s111]
          %121 = vst [vmem:[%s119] sm:%s111] %v120
        $region98: #{tpu_custom_call.1} parent=92 // loop_footer
          %s117 = sadd.s32 1, %s113
        $region99: #{tpu_custom_call.1} parent=92 // loop_footer_branch
          %112 = sbr.rel target = $region95
        $region100: #{tpu_custom_call.1} parent=92 // loop_exit
          _
      $region93: #{tpu_custom_call.1} parent=85 // pred_fallthru
        _
      // Predicated region
      $region116: #{tpu_custom_call.1} parent=85 // pred_check
        _
      $region117: #{tpu_custom_call.1} parent=85 // pred_check_branch
        %138 = sbr.rel (0) target = $region119
      $region118: #{tpu_custom_call.1} parent=85 // pred_region
        %139 = vsyncadd [#allocation13], 128
      $region119: #{tpu_custom_call.1} parent=85 // pred_fallthru
        _
      %s140 = smul.u32 8, 1
      %s141 = sshll.u32 %s140, 4
      %142 = dma.done [#allocation13], %s141
  $region13: #{tpu_custom_call.1} parent=0 // pred_fallthru
    _
  %v143 = vld [vmem:[%s0] sm:$0xff]
  %v144 = vld [vmem:[%s0 + $0x8] sm:$0xff]
  %v145 = vld [vmem:[%s0 + $0x10] sm:$0xff]
  %v146 = vld [vmem:[%s0 + $0x18] sm:$0xff]
  %v147 = vld [vmem:[%s0 + $0x20] sm:$0xff]
  %v148 = vld [vmem:[%s0 + $0x28] sm:$0xff]
  %v149 = vld [vmem:[#allocation4] sm:$0xff]
  %v150 = vld [vmem:[#allocation4 + $0x8] sm:$0xff]
  %v151 = vld [vmem:[#allocation6] sm:$0x1]
  %v152 = vperm.slane %v151, 0
  %vm153 = vcmask 130048
  %v155 = vsel %vm153, %v143, 0
  %v158 = vsel %vm153, %v144, 0
  %v161 = vsel %vm153, %v145, 0
  %v164 = vsel %vm153, %v146, 0
  %v167 = vsel %vm153, %v147, 0
  %v170 = vsel %vm153, %v148, 0
  %172 = vmatpush.msra.mxu0 0.0
  %173 = vmatpush.msra.mxu0 0.0
  %174 = vmatpush.msra.mxu0 0.0
  %175 = vmatpush.msra.mxu0 0.0
  %176 = vmatpush.msra.mxu0 0.0
  %177 = vmatpush.msra.mxu0 0.0
  %178 = vmatpush.msra.mxu0 0.0
  %179 = vmatpush.msra.mxu0 0.0
  %180 = vmatpush.msra.mxu0 0.0
  %181 = vmatpush.msra.mxu0 0.0
  %182 = vmatpush.msra.mxu0 0.0
  %183 = vmatpush.msra.mxu0 0.0
  %184 = vmatpush.msra.mxu0 0.0
  %185 = vmatpush.msra.mxu0 0.0
  %186 = vmatpush.msra.mxu0 %v150
  %187 = vmatpush.msra.mxu0 %v149
  %188 = vmatmul.f32.gmra.mxu0 %v155
  %v189 = vpop.f32.mrf.mxu0
  %v190 = vadd.f32 %v152, %v189
  %191 = vmatmul.f32.gmra.mxu0 %v158
  %v192 = vpop.f32.mrf.mxu0
  %v193 = vadd.f32 %v152, %v192
  %194 = vmatmul.f32.gmra.mxu0 %v161
  %v195 = vpop.f32.mrf.mxu0
  %v196 = vadd.f32 %v152, %v195
  %197 = vmatmul.f32.gmra.mxu0 %v164
  %v198 = vpop.f32.mrf.mxu0
  %v199 = vadd.f32 %v152, %v198
  %200 = vmatmul.f32.gmra.mxu0 %v167
  %v201 = vpop.f32.mrf.mxu0
  %v202 = vadd.f32 %v152, %v201
  %203 = vmatmul.f32.gmra.mxu0 %v170
  %v204 = vpop.f32.mrf.mxu0
  %v205 = vadd.f32 %v152, %v204
  %206 = vdwg.mxu0
  %vm207 = vcmask 785408
  %208 = vst.msk [vmem:[#allocation3] sm:$0xff] %vm207, %v190
  %209 = vst.msk [vmem:[#allocation3 + $0x8] sm:$0xff] %vm207, %v193
  %210 = vst.msk [vmem:[#allocation3 + $0x10] sm:$0xff] %vm207, %v196
  %211 = vst.msk [vmem:[#allocation3 + $0x18] sm:$0xff] %vm207, %v199
  %212 = vst.msk [vmem:[#allocation3 + $0x20] sm:$0xff] %vm207, %v202
  %213 = vst.msk [vmem:[#allocation3 + $0x28] sm:$0xff] %vm207, %v205
  %v214 = vld [vmem:[#allocation5] sm:$0xff]
  %v215 = vld [vmem:[#allocation5 + $0x8] sm:$0xff]
  %v216 = vld [vmem:[#allocation5 + $0x10] sm:$0xff]
  %v217 = vld [vmem:[#allocation5 + $0x18] sm:$0xff]
  %v218 = vld [vmem:[#allocation6 + $0x1] sm:$0x1]
  %v219 = vperm.slane %v218, 0
  %v220 = vld [vmem:[#allocation2] sm:$0xff]
  %v221 = vld [vmem:[#allocation3] sm:$0xff]
  %v222 = vld [vmem:[%s1] sm:$0xff]
  %vm223 = vcmask 261120
  %v225 = vsel %vm223, %v220, 0
  %227 = vmatpush.msra.mxu0 0.0
  %228 = vmatpush.msra.mxu0 0.0
  %229 = vmatpush.msra.mxu0 0.0
  %230 = vmatpush.msra.mxu0 0.0
  %231 = vmatpush.msra.mxu0 0.0
  %232 = vmatpush.msra.mxu0 0.0
  %233 = vmatpush.msra.mxu0 0.0
  %234 = vmatpush.msra.mxu0 0.0
  %235 = vmatpush.msra.mxu0 0.0
  %236 = vmatpush.msra.mxu0 0.0
  %237 = vmatpush.msra.mxu0 0.0
  %238 = vmatpush.msra.mxu0 0.0
  %239 = vmatpush.msra.mxu0 %v217
  %240 = vmatpush.msra.mxu0 %v216
  %241 = vmatpush.msra.mxu0 %v215
  %242 = vmatpush.msra.mxu0 %v214
  %243 = vmatmul.f32.gmra.mxu0 %v225
  %v244 = vpop.f32.mrf.mxu0
  %v245 = vadd.f32 %v219, %v244
  %246 = vdwg.mxu0
  %v247 = vadd.f32 %v221, %v245
  %v248 = vxor.u32 %v247, 2147483648
  %v249 = vmul.f32 %v248, 1.442695
  %v250 = vpow.pop %v249
  %v251 = vadd.f32 %v250, 1.0
  %v252 = vrcp.pop %v251
  %v253 = vmul.f32 %v251, %v252
  %v254 = vsub.f32 1.0, %v253
  %v255 = vmul.f32 %v252, %v254
  %v256 = vadd.f32 %v252, %v255
  %vm257 = vweird.f32 %v251
  %vm258 = vweird.f32 %v252
  %vm259 = vmor %vm257, %vm258
  %v260 = vsel %vm259, %v252, %v256
  %v261 = vand.u32 2147483647, %v251
  %vm262 = vcmp.eq.f32.partialorder %v261, 8.507059e+37
  %v263 = vand.u32 %v251, 2147483648
  %v264 = vor.u32 1.1754944e-38, %v263
  %v265 = vsel %vm262, %v264, %v260
  %v266 = vmul.f32 1.0, %v265
  %268 = vrot.lane.b32.xlu0 %v266, 96
  %v269 = vpop.permute.xlu0 %268
  %v271 = vmul.f32 %v222, %v269
  %273 = vrot.lane.b32.xlu0 %v245, 64
  %v274 = vpop.permute.xlu0 %273
  %v276 = vmul.f32 %v266, %v274
  %278 = vrot.lane.b32.xlu0 %v276, 64
  %v279 = vpop.permute.xlu0 %278
  %v281 = vadd.f32 %v221, %v279
  %v282 = vtanh.pop %v281
  %283 = vrot.lane.b32.xlu0 %v220, 64
  %v284 = vpop.permute.xlu0 %283
  %v286 = vsub.f32 %v282, %v284
  %288 = vrot.lane.b32.xlu0 %v286, 64
  %v289 = vpop.permute.xlu0 %288
  %v291 = vmul.f32 %v271, %v289
  %v292 = vadd.f32 %v220, %v291
  %293 = vst.msk [vmem:[%s6] sm:$0xff] %vm223, %v292
  %s294 = scalar_lea.vmem [#allocation3], 8
  %v295 = vld [vmem:[%s294] sm:$0xff]
  %s296 = scalar_lea.vmem %s1, 8
  %v297 = vld [vmem:[%s296] sm:$0xff]
  %v299 = vsel %vm223, %v292, 0
  %301 = vmatpush.msra.mxu0 0.0
  %302 = vmatpush.msra.mxu0 0.0
  %303 = vmatpush.msra.mxu0 0.0
  %304 = vmatpush.msra.mxu0 0.0
  %305 = vmatpush.msra.mxu0 0.0
  %306 = vmatpush.msra.mxu0 0.0
  %307 = vmatpush.msra.mxu0 0.0
  %308 = vmatpush.msra.mxu0 0.0
  %309 = vmatpush.msra.mxu0 0.0
  %310 = vmatpush.msra.mxu0 0.0
  %311 = vmatpush.msra.mxu0 0.0
  %312 = vmatpush.msra.mxu0 0.0
  %313 = vmatpush.msra.mxu0 %v217
  %314 = vmatpush.msra.mxu0 %v216
  %315 = vmatpush.msra.mxu0 %v215
  %316 = vmatpush.msra.mxu0 %v214
  %317 = vmatmul.f32.gmra.mxu0 %v299
  %v318 = vpop.f32.mrf.mxu0
  %v319 = vadd.f32 %v219, %v318
  %320 = vdwg.mxu0
  %v321 = vadd.f32 %v295, %v319
  %v322 = vxor.u32 %v321, 2147483648
  %v323 = vmul.f32 %v322, 1.442695
  %v324 = vpow.pop %v323
  %v325 = vadd.f32 %v324, 1.0
  %v326 = vrcp.pop %v325
  %v327 = vmul.f32 %v325, %v326
  %v328 = vsub.f32 1.0, %v327
  %v329 = vmul.f32 %v326, %v328
  %v330 = vadd.f32 %v326, %v329
  %vm331 = vweird.f32 %v325
  %vm332 = vweird.f32 %v326
  %vm333 = vmor %vm331, %vm332
  %v334 = vsel %vm333, %v326, %v330
  %v335 = vand.u32 2147483647, %v325
  %vm336 = vcmp.eq.f32.partialorder %v335, 8.507059e+37
  %v337 = vand.u32 %v325, 2147483648
  %v338 = vor.u32 1.1754944e-38, %v337
  %v339 = vsel %vm336, %v338, %v334
  %v340 = vmul.f32 1.0, %v339
  %342 = vrot.lane.b32.xlu0 %v340, 96
  %v343 = vpop.permute.xlu0 %342
  %v345 = vmul.f32 %v297, %v343
  %347 = vrot.lane.b32.xlu0 %v319, 64
  %v348 = vpop.permute.xlu0 %347
  %v350 = vmul.f32 %v340, %v348
  %352 = vrot.lane.b32.xlu0 %v350, 64
  %v353 = vpop.permute.xlu0 %352
  %v355 = vadd.f32 %v295, %v353
  %v356 = vtanh.pop %v355
  %357 = vrot.lane.b32.xlu0 %v292, 64
  %v358 = vpop.permute.xlu0 %357
  %v360 = vsub.f32 %v356, %v358
  %362 = vrot.lane.b32.xlu0 %v360, 64
  %v363 = vpop.permute.xlu0 %362
  %v365 = vmul.f32 %v345, %v363
  %v366 = vadd.f32 %v292, %v365
  %s367 = scalar_lea.vmem %s6, 8
  %368 = vst.msk [vmem:[%s367] sm:$0xff] %vm223, %v366
  %s369 = scalar_lea.vmem [#allocation3], 16
  %v370 = vld [vmem:[%s369] sm:$0xff]
  %s371 = scalar_lea.vmem %s1, 16
  %v372 = vld [vmem:[%s371] sm:$0xff]
  %v374 = vsel %vm223, %v366, 0
  %376 = vmatpush.msra.mxu0 0.0
  %377 = vmatpush.msra.mxu0 0.0
  %378 = vmatpush.msra.mxu0 0.0
  %379 = vmatpush.msra.mxu0 0.0
  %380 = vmatpush.msra.mxu0 0.0
  %381 = vmatpush.msra.mxu0 0.0
  %382 = vmatpush.msra.mxu0 0.0
  %383 = vmatpush.msra.mxu0 0.0
  %384 = vmatpush.msra.mxu0 0.0
  %385 = vmatpush.msra.mxu0 0.0
  %386 = vmatpush.msra.mxu0 0.0
  %387 = vmatpush.msra.mxu0 0.0
  %388 = vmatpush.msra.mxu0 %v217
  %389 = vmatpush.msra.mxu0 %v216
  %390 = vmatpush.msra.mxu0 %v215
  %391 = vmatpush.msra.mxu0 %v214
  %392 = vmatmul.f32.gmra.mxu0 %v374
  %v393 = vpop.f32.mrf.mxu0
  %v394 = vadd.f32 %v219, %v393
  %395 = vdwg.mxu0
  %v396 = vadd.f32 %v370, %v394
  %v397 = vxor.u32 %v396, 2147483648
  %v398 = vmul.f32 %v397, 1.442695
  %v399 = vpow.pop %v398
  %v400 = vadd.f32 %v399, 1.0
  %v401 = vrcp.pop %v400
  %v402 = vmul.f32 %v400, %v401
  %v403 = vsub.f32 1.0, %v402
  %v404 = vmul.f32 %v401, %v403
  %v405 = vadd.f32 %v401, %v404
  %vm406 = vweird.f32 %v400
  %vm407 = vweird.f32 %v401
  %vm408 = vmor %vm406, %vm407
  %v409 = vsel %vm408, %v401, %v405
  %v410 = vand.u32 2147483647, %v400
  %vm411 = vcmp.eq.f32.partialorder %v410, 8.507059e+37
  %v412 = vand.u32 %v400, 2147483648
  %v413 = vor.u32 1.1754944e-38, %v412
  %v414 = vsel %vm411, %v413, %v409
  %v415 = vmul.f32 1.0, %v414
  %417 = vrot.lane.b32.xlu0 %v415, 96
  %v418 = vpop.permute.xlu0 %417
  %v420 = vmul.f32 %v372, %v418
  %422 = vrot.lane.b32.xlu0 %v394, 64
  %v423 = vpop.permute.xlu0 %422
  %v425 = vmul.f32 %v415, %v423
  %427 = vrot.lane.b32.xlu0 %v425, 64
  %v428 = vpop.permute.xlu0 %427
  %v430 = vadd.f32 %v370, %v428
  %v431 = vtanh.pop %v430
  %432 = vrot.lane.b32.xlu0 %v366, 64
  %v433 = vpop.permute.xlu0 %432
  %v435 = vsub.f32 %v431, %v433
  %437 = vrot.lane.b32.xlu0 %v435, 64
  %v438 = vpop.permute.xlu0 %437
  %v440 = vmul.f32 %v420, %v438
  %v441 = vadd.f32 %v366, %v440
  %s442 = scalar_lea.vmem %s6, 16
  %443 = vst.msk [vmem:[%s442] sm:$0xff] %vm223, %v441
  %s444 = scalar_lea.vmem [#allocation3], 24
  %v445 = vld [vmem:[%s444] sm:$0xff]
  %s446 = scalar_lea.vmem %s1, 24
  %v447 = vld [vmem:[%s446] sm:$0xff]
  %v449 = vsel %vm223, %v441, 0
  %451 = vmatpush.msra.mxu0 0.0
  %452 = vmatpush.msra.mxu0 0.0
  %453 = vmatpush.msra.mxu0 0.0
  %454 = vmatpush.msra.mxu0 0.0
  %455 = vmatpush.msra.mxu0 0.0
  %456 = vmatpush.msra.mxu0 0.0
  %457 = vmatpush.msra.mxu0 0.0
  %458 = vmatpush.msra.mxu0 0.0
  %459 = vmatpush.msra.mxu0 0.0
  %460 = vmatpush.msra.mxu0 0.0
  %461 = vmatpush.msra.mxu0 0.0
  %462 = vmatpush.msra.mxu0 0.0
  %463 = vmatpush.msra.mxu0 %v217
  %464 = vmatpush.msra.mxu0 %v216
  %465 = vmatpush.msra.mxu0 %v215
  %466 = vmatpush.msra.mxu0 %v214
  %467 = vmatmul.f32.gmra.mxu0 %v449
  %v468 = vpop.f32.mrf.mxu0
  %v469 = vadd.f32 %v219, %v468
  %470 = vdwg.mxu0
  %v471 = vadd.f32 %v445, %v469
  %v472 = vxor.u32 %v471, 2147483648
  %v473 = vmul.f32 %v472, 1.442695
  %v474 = vpow.pop %v473
  %v475 = vadd.f32 %v474, 1.0
  %v476 = vrcp.pop %v475
  %v477 = vmul.f32 %v475, %v476
  %v478 = vsub.f32 1.0, %v477
  %v479 = vmul.f32 %v476, %v478
  %v480 = vadd.f32 %v476, %v479
  %vm481 = vweird.f32 %v475
  %vm482 = vweird.f32 %v476
  %vm483 = vmor %vm481, %vm482
  %v484 = vsel %vm483, %v476, %v480
  %v485 = vand.u32 2147483647, %v475
  %vm486 = vcmp.eq.f32.partialorder %v485, 8.507059e+37
  %v487 = vand.u32 %v475, 2147483648
  %v488 = vor.u32 1.1754944e-38, %v487
  %v489 = vsel %vm486, %v488, %v484
  %v490 = vmul.f32 1.0, %v489
  %492 = vrot.lane.b32.xlu0 %v490, 96
  %v493 = vpop.permute.xlu0 %492
  %v495 = vmul.f32 %v447, %v493
  %497 = vrot.lane.b32.xlu0 %v469, 64
  %v498 = vpop.permute.xlu0 %497
  %v500 = vmul.f32 %v490, %v498
  %502 = vrot.lane.b32.xlu0 %v500, 64
  %v503 = vpop.permute.xlu0 %502
  %v505 = vadd.f32 %v445, %v503
  %v506 = vtanh.pop %v505
  %507 = vrot.lane.b32.xlu0 %v441, 64
  %v508 = vpop.permute.xlu0 %507
  %v510 = vsub.f32 %v506, %v508
  %512 = vrot.lane.b32.xlu0 %v510, 64
  %v513 = vpop.permute.xlu0 %512
  %v515 = vmul.f32 %v495, %v513
  %v516 = vadd.f32 %v441, %v515
  %s517 = scalar_lea.vmem %s6, 24
  %518 = vst.msk [vmem:[%s517] sm:$0xff] %vm223, %v516
  %s519 = scalar_lea.vmem [#allocation3], 32
  %v520 = vld [vmem:[%s519] sm:$0xff]
  %s521 = scalar_lea.vmem %s1, 32
  %v522 = vld [vmem:[%s521] sm:$0xff]
  %v524 = vsel %vm223, %v516, 0
  %526 = vmatpush.msra.mxu0 0.0
  %527 = vmatpush.msra.mxu0 0.0
  %528 = vmatpush.msra.mxu0 0.0
  %529 = vmatpush.msra.mxu0 0.0
  %530 = vmatpush.msra.mxu0 0.0
  %531 = vmatpush.msra.mxu0 0.0
  %532 = vmatpush.msra.mxu0 0.0
  %533 = vmatpush.msra.mxu0 0.0
  %534 = vmatpush.msra.mxu0 0.0
  %535 = vmatpush.msra.mxu0 0.0
  %536 = vmatpush.msra.mxu0 0.0
  %537 = vmatpush.msra.mxu0 0.0
  %538 = vmatpush.msra.mxu0 %v217
  %539 = vmatpush.msra.mxu0 %v216
  %540 = vmatpush.msra.mxu0 %v215
  %541 = vmatpush.msra.mxu0 %v214
  %542 = vmatmul.f32.gmra.mxu0 %v524
  %v543 = vpop.f32.mrf.mxu0
  %v544 = vadd.f32 %v219, %v543
  %545 = vdwg.mxu0
  %v546 = vadd.f32 %v520, %v544
  %v547 = vxor.u32 %v546, 2147483648
  %v548 = vmul.f32 %v547, 1.442695
  %v549 = vpow.pop %v548
  %v550 = vadd.f32 %v549, 1.0
  %v551 = vrcp.pop %v550
  %v552 = vmul.f32 %v550, %v551
  %v553 = vsub.f32 1.0, %v552
  %v554 = vmul.f32 %v551, %v553
  %v555 = vadd.f32 %v551, %v554
  %vm556 = vweird.f32 %v550
  %vm557 = vweird.f32 %v551
  %vm558 = vmor %vm556, %vm557
  %v559 = vsel %vm558, %v551, %v555
  %v560 = vand.u32 2147483647, %v550
  %vm561 = vcmp.eq.f32.partialorder %v560, 8.507059e+37
  %v562 = vand.u32 %v550, 2147483648
  %v563 = vor.u32 1.1754944e-38, %v562
  %v564 = vsel %vm561, %v563, %v559
  %v565 = vmul.f32 1.0, %v564
  %567 = vrot.lane.b32.xlu0 %v565, 96
  %v568 = vpop.permute.xlu0 %567
  %v570 = vmul.f32 %v522, %v568
  %572 = vrot.lane.b32.xlu0 %v544, 64
  %v573 = vpop.permute.xlu0 %572
  %v575 = vmul.f32 %v565, %v573
  %577 = vrot.lane.b32.xlu0 %v575, 64
  %v578 = vpop.permute.xlu0 %577
  %v580 = vadd.f32 %v520, %v578
  %v581 = vtanh.pop %v580
  %582 = vrot.lane.b32.xlu0 %v516, 64
  %v583 = vpop.permute.xlu0 %582
  %v585 = vsub.f32 %v581, %v583
  %587 = vrot.lane.b32.xlu0 %v585, 64
  %v588 = vpop.permute.xlu0 %587
  %v590 = vmul.f32 %v570, %v588
  %v591 = vadd.f32 %v516, %v590
  %s592 = scalar_lea.vmem %s6, 32
  %593 = vst.msk [vmem:[%s592] sm:$0xff] %vm223, %v591
  %s594 = scalar_lea.vmem [#allocation3], 40
  %v595 = vld [vmem:[%s594] sm:$0xff]
  %s596 = scalar_lea.vmem %s1, 40
  %v597 = vld [vmem:[%s596] sm:$0xff]
  %v599 = vsel %vm223, %v591, 0
  %601 = vmatpush.msra.mxu0 0.0
  %602 = vmatpush.msra.mxu0 0.0
  %603 = vmatpush.msra.mxu0 0.0
  %604 = vmatpush.msra.mxu0 0.0
  %605 = vmatpush.msra.mxu0 0.0
  %606 = vmatpush.msra.mxu0 0.0
  %607 = vmatpush.msra.mxu0 0.0
  %608 = vmatpush.msra.mxu0 0.0
  %609 = vmatpush.msra.mxu0 0.0
  %610 = vmatpush.msra.mxu0 0.0
  %611 = vmatpush.msra.mxu0 0.0
  %612 = vmatpush.msra.mxu0 0.0
  %613 = vmatpush.msra.mxu0 %v217
  %614 = vmatpush.msra.mxu0 %v216
  %615 = vmatpush.msra.mxu0 %v215
  %616 = vmatpush.msra.mxu0 %v214
  %617 = vmatmul.f32.gmra.mxu0 %v599
  %v618 = vpop.f32.mrf.mxu0
  %v619 = vadd.f32 %v219, %v618
  %620 = vdwg.mxu0
  %v621 = vadd.f32 %v595, %v619
  %v622 = vxor.u32 %v621, 2147483648
  %v623 = vmul.f32 %v622, 1.442695
  %v624 = vpow.pop %v623
  %v625 = vadd.f32 %v624, 1.0
  %v626 = vrcp.pop %v625
  %v627 = vmul.f32 %v625, %v626
  %v628 = vsub.f32 1.0, %v627
  %v629 = vmul.f32 %v626, %v628
  %v630 = vadd.f32 %v626, %v629
  %vm631 = vweird.f32 %v625
  %vm632 = vweird.f32 %v626
  %vm633 = vmor %vm631, %vm632
  %v634 = vsel %vm633, %v626, %v630
  %v635 = vand.u32 2147483647, %v625
  %vm636 = vcmp.eq.f32.partialorder %v635, 8.507059e+37
  %v637 = vand.u32 %v625, 2147483648
  %v638 = vor.u32 1.1754944e-38, %v637
  %v639 = vsel %vm636, %v638, %v634
  %v640 = vmul.f32 1.0, %v639
  %642 = vrot.lane.b32.xlu0 %v640, 96
  %v643 = vpop.permute.xlu0 %642
  %v645 = vmul.f32 %v597, %v643
  %647 = vrot.lane.b32.xlu0 %v619, 64
  %v648 = vpop.permute.xlu0 %647
  %v650 = vmul.f32 %v640, %v648
  %652 = vrot.lane.b32.xlu0 %v650, 64
  %v653 = vpop.permute.xlu0 %652
  %v655 = vadd.f32 %v595, %v653
  %v656 = vtanh.pop %v655
  %657 = vrot.lane.b32.xlu0 %v591, 64
  %v658 = vpop.permute.xlu0 %657
  %v660 = vsub.f32 %v656, %v658
  %662 = vrot.lane.b32.xlu0 %v660, 64
  %v663 = vpop.permute.xlu0 %662
  %v665 = vmul.f32 %v645, %v663
  %v666 = vadd.f32 %v591, %v665
  %s667 = scalar_lea.vmem %s6, 40
  %668 = vst.msk [vmem:[%s667] sm:$0xff] %vm223, %v666
  %669 = vst.msk [vmem:[#allocation2] sm:$0xff] %vm223, %v666
  // Predicated region
  $region120: #{tpu_custom_call.1} parent=0 // pred_check
    _
  $region121: #{tpu_custom_call.1} parent=0 // pred_check_branch
    %671 = sbr.rel (0) target = $region123
  $region122: #{tpu_custom_call.1} parent=0 // pred_region
    _
  $region123: #{tpu_custom_call.1} parent=0 // pred_fallthru
    _
  // Predicated region
  $region124: #{tpu_custom_call.1} parent=0 // pred_check
    _
  $region125: #{tpu_custom_call.1} parent=0 // pred_check_branch
    %673 = sbr.rel (0) target = $region127
  $region126: #{tpu_custom_call.1} parent=0 // pred_region
    _
  $region127: #{tpu_custom_call.1} parent=0 // pred_fallthru
    _

</llo_original>
